<compile_context>
chip_gen: v7x
topology: tpu7x:2x2x1
jax: 0.10.0
libtpu: 0.0.40
codegen_flags: <defaults>
</compile_context>

<pallas_src>
import jax
import jax.numpy as jnp
from jax.experimental import pallas as pl
from jax.experimental.pallas import tpu as pltpu  # noqa: F401  (TPU backend)

# ---------------- problem configuration (small, consistent with the module) ---
BATCH = 2
TIME = 4            # "time" channel axis of the NCHW-like input
HEIGHT = 16
WIDTH = 16
FUTURE_NUM_FRAMES = 8
NUM_TRAJECTORIES = 3
NUM_PREDS = 2 * FUTURE_NUM_FRAMES * NUM_TRAJECTORIES      # 48
OUT_FEATURES = NUM_PREDS + NUM_TRAJECTORIES               # 51
OUT_PADDED = 128                                          # lane-dense output slab
IN_FEATURES = TIME * HEIGHT * WIDTH                        # 1024


def _head_kernel(x_ref, w_ref, b_ref, out_ref):
    """Linear head (matmul + bias) with the confidence softmax fused in.

    x_ref:   (BATCH, IN_FEATURES)       f32
    w_ref:   (IN_FEATURES, OUT_FEATURES) bf16   (unpadded: 51 columns)
    b_ref:   (1, OUT_FEATURES)          f32
    out_ref: (BATCH, OUT_PADDED)        f32
      lanes [0:48)  -> flat preds
      lanes [48:51) -> softmaxed confidences
      lanes [51:128)-> zeros
    """
    x = x_ref[...].astype(jnp.bfloat16)               # cheap VPU cast; bf16 MXU path
    feats = jnp.dot(x, w_ref[...], preferred_element_type=jnp.float32) + b_ref[...]

    # Fused epilogue: 3-wide softmax over the confidence logits (dim=1).
    conf_logits = feats[:, NUM_PREDS:]                      # (bs, 3)
    m = jnp.max(conf_logits, axis=-1, keepdims=True)        # tiny XLU reduce
    e = jnp.exp(conf_logits - m)                             # EUP
    s = jnp.sum(e, axis=-1, keepdims=True)                   # tiny XLU reduce
    conf = e * pl.reciprocal(s, approx=True)                  # EUP slot, ~free

    # One unmasked 128-lane store for the zero slab, then two tiny masked
    # sub-range stores (~1 KiB total).
    out_ref[...] = jnp.zeros(out_ref.shape, out_ref.dtype)
    out_ref[:, 0:NUM_PREDS] = feats[:, :NUM_PREDS]
    out_ref[:, NUM_PREDS:OUT_FEATURES] = conf


def prepare_params(w, b):
    """One-time parameter prep (hoisted out of the per-call path).

    w: (IN_FEATURES, OUT_FEATURES) f32 -> bf16 (halves the dominant weight DMA)
    b: (1, OUT_FEATURES) f32 (unchanged)
    """
    return w.astype(jnp.bfloat16), b.astype(jnp.float32)


@jax.jit
def model_with_confidence(x_nchw, w_bf16, b):
    """Runs the Pallas kernel and returns (preds, conf).

    x_nchw: (BATCH, TIME, HEIGHT, WIDTH) f32
    w_bf16: (IN_FEATURES, OUT_FEATURES)  bf16 (prepared once by prepare_params)
    b:      (1, OUT_FEATURES)            f32
    returns:
      preds: (BATCH, NUM_TRAJECTORIES, FUTURE_NUM_FRAMES, 2) f32
      conf:  (BATCH, NUM_TRAJECTORIES) f32  (already softmaxed in-kernel)
    """
    bs = x_nchw.shape[0]
    x_flat = x_nchw.reshape(bs, -1).astype(jnp.float32)      # glue: flatten NCHW

    cost = pl.CostEstimate(
        flops=2 * bs * IN_FEATURES * OUT_FEATURES,
        transcendentals=bs * NUM_TRAJECTORIES,
        bytes_accessed=(
            bs * IN_FEATURES * 4              # x (f32)
            + IN_FEATURES * OUT_FEATURES * 2  # w (bf16, unpadded)
            + OUT_FEATURES * 4                # b (f32)
            + bs * OUT_PADDED * 4             # output slab (f32)
        ),
    )

    feats = pl.pallas_call(
        _head_kernel,
        out_shape=jax.ShapeDtypeStruct((bs, OUT_PADDED), jnp.float32),
        # Tiny shapes: single grid point, full-extent blocks resident in VMEM
        # (full-extent blocks are exempt from the (8,128) divisibility rule).
        in_specs=[
            pl.BlockSpec((bs, IN_FEATURES), lambda: (0, 0)),
            pl.BlockSpec((IN_FEATURES, OUT_FEATURES), lambda: (0, 0)),
            pl.BlockSpec((1, OUT_FEATURES), lambda: (0, 0)),
        ],
        out_specs=pl.BlockSpec((bs, OUT_PADDED), lambda: (0, 0)),
        cost_estimate=cost,
    )(x_flat, w_bf16, b)

    # glue: torch.split + view (softmax already done in-kernel).
    preds = feats[:, :NUM_PREDS].reshape(
        bs, NUM_TRAJECTORIES, FUTURE_NUM_FRAMES, 2
    )
    conf = feats[:, NUM_PREDS:OUT_FEATURES]
    return preds, conf


if __name__ == "__main__":
    key = jax.random.PRNGKey(0)
    k_x, k_w, k_b = jax.random.split(key, 3)

    # deterministic synthetic input and backbone parameters
    x = jax.random.normal(k_x, (BATCH, TIME, HEIGHT, WIDTH), dtype=jnp.float32)
    w = jax.random.normal(k_w, (IN_FEATURES, OUT_FEATURES), dtype=jnp.float32) * 0.02
    b = jax.random.normal(k_b, (1, OUT_FEATURES), dtype=jnp.float32) * 0.01

    # one-time parameter prep (hoisted out of the per-call path)
    w_bf16, b_f32 = prepare_params(w, b)
    jax.block_until_ready((w_bf16, b_f32))

    preds, conf = model_with_confidence(x, w_bf16, b_f32)
    jax.block_until_ready((preds, conf))

    # sanity checks mirroring the PyTorch forward contract
    assert preds.shape == (BATCH, NUM_TRAJECTORIES, FUTURE_NUM_FRAMES, 2)
    assert conf.shape == (BATCH, NUM_TRAJECTORIES)
    # approx reciprocal in-kernel -> slightly looser sum-to-one tolerance
    assert jnp.allclose(jnp.sum(conf, axis=1), 1.0, atol=5e-3)

    # reference check against plain f32 JAX (kernel uses bf16 weights -> looser atol)
    feats_ref = x.reshape(BATCH, -1) @ w + b
    preds_ref = feats_ref[:, :NUM_PREDS].reshape(
        BATCH, NUM_TRAJECTORIES, FUTURE_NUM_FRAMES, 2
    )
    conf_ref = jax.nn.softmax(feats_ref[:, NUM_PREDS:], axis=1)
    assert jnp.allclose(preds, preds_ref, atol=2e-2, rtol=1e-2)
    assert jnp.allclose(conf, conf_ref, atol=5e-3)

    print("KERNEL_OK")
</pallas_src>

<mosaic_0001>
module attributes {stable_mosaic.version = 11 : i64} {
  func.func @_head_kernel(%arg0: memref<2x1024xf32, #tpu.memory_space<vmem>>, %arg1: memref<1024x51xbf16, #tpu.memory_space<vmem>>, %arg2: memref<1x51xf32, #tpu.memory_space<vmem>>, %arg3: memref<2x128xf32, #tpu.memory_space<vmem>>) attributes {dimension_semantics = [], scalar_prefetch = 0 : i64, scratch_operands = 0 : i64, tpu.core_type = #tpu.core_type<tc>} {
    %c0 = arith.constant 0 : index
    %c0_0 = arith.constant 0 : index
    %0 = vector.load %arg0[%c0, %c0_0] : memref<2x1024xf32, #tpu.memory_space<vmem>>, vector<2x1024xf32>
    %1 = arith.truncf %0 : vector<2x1024xf32> to vector<2x1024xbf16>
    %c0_1 = arith.constant 0 : index
    %c0_2 = arith.constant 0 : index
    %2 = vector.load %arg1[%c0_1, %c0_2] : memref<1024x51xbf16, #tpu.memory_space<vmem>>, vector<1024x51xbf16>
    %cst = arith.constant dense<0.000000e+00> : vector<2x51xf32>
    %3 = tpu.matmul %1, %2, %cst {dimension_numbers = #tpu.dot_dimension_numbers<[1], [0], [0], [1], [0, 0, 1, 1], [], []>} : vector<2x1024xbf16>, vector<1024x51xbf16>, vector<2x51xf32> -> vector<2x51xf32>
    %c0_3 = arith.constant 0 : index
    %c0_4 = arith.constant 0 : index
    %4 = vector.load %arg2[%c0_3, %c0_4] : memref<1x51xf32, #tpu.memory_space<vmem>>, vector<1x51xf32>
    %5 = vector.broadcast %4 : vector<1x51xf32> to vector<2x51xf32>
    %6 = arith.addf %3, %5 : vector<2x51xf32>
    %7 = vector.extract_strided_slice %6 {offsets = [0, 48], sizes = [2, 3], strides = [1, 1]} : vector<2x51xf32> to vector<2x3xf32>
    %cst_5 = arith.constant dense<0xFF800000> : vector<2xf32>
    %8 = vector.multi_reduction <maximumf>, %7, %cst_5 [1] : vector<2x3xf32> to vector<2xf32>
    %9 = vector.shape_cast %8 : vector<2xf32> to vector<2x1xf32>
    %10 = vector.broadcast %9 : vector<2x1xf32> to vector<2x3xf32>
    %11 = arith.subf %7, %10 : vector<2x3xf32>
    %12 = math.exp %11 : vector<2x3xf32>
    %cst_6 = arith.constant dense<0.000000e+00> : vector<2xf32>
    %13 = vector.multi_reduction <add>, %12, %cst_6 [1] : vector<2x3xf32> to vector<2xf32>
    %14 = vector.shape_cast %13 : vector<2xf32> to vector<2x1xf32>
    %15 = tpu.reciprocal %14 {approx = true} : vector<2x1xf32> -> vector<2x1xf32>
    %16 = vector.broadcast %15 : vector<2x1xf32> to vector<2x3xf32>
    %17 = arith.mulf %12, %16 : vector<2x3xf32>
    %cst_7 = arith.constant 0.000000e+00 : f32
    %18 = vector.broadcast %cst_7 : f32 to vector<2x128xf32>
    %c0_8 = arith.constant 0 : index
    %c0_9 = arith.constant 0 : index
    %19 = vector.load %arg3[%c0_8, %c0_9] : memref<2x128xf32, #tpu.memory_space<vmem>>, vector<2x128xf32>
    tpu.vector_store %arg3[%c0_8, %c0_9], %18 {strides = array<i32>} : memref<2x128xf32, #tpu.memory_space<vmem>>, vector<2x128xf32>,
    %20 = vector.extract_strided_slice %6 {offsets = [0, 0], sizes = [2, 48], strides = [1, 1]} : vector<2x51xf32> to vector<2x48xf32>
    %c0_10 = arith.constant 0 : index
    %c0_11 = arith.constant 0 : index
    %21 = vector.load %arg3[%c0_10, %c0_11] : memref<2x128xf32, #tpu.memory_space<vmem>>, vector<2x48xf32>
    tpu.vector_store %arg3[%c0_10, %c0_11], %20 {strides = array<i32>} : memref<2x128xf32, #tpu.memory_space<vmem>>, vector<2x48xf32>,
    %c0_12 = arith.constant 0 : index
    %c48 = arith.constant 48 : index
    %22 = vector.load %arg3[%c0_12, %c48] : memref<2x128xf32, #tpu.memory_space<vmem>>, vector<2x3xf32>
    tpu.vector_store %arg3[%c0_12, %c48], %17 {strides = array<i32>} : memref<2x128xf32, #tpu.memory_space<vmem>>, vector<2x3xf32>,
    return
  }
}

</mosaic_0001>

<llo_original>
// kernel: model_with_confidence.1
$region0: #{model_with_confidence.1}
  #allocation0 [shape = 'u32[]', space=smem, size = 0x4, offset = 0x4, fixed_abs, tag = 'smem constant byte address 0x4 - core index']
  #allocation1 [shape = 'u32[144,128]{1,0:T(1,128)}', space=vmem, size = 0x12000, scoped, tag = 'internal scratch']
  %s0 = inlined_call_operand.vmem [shape: f32[2,1024], index: 0, kind: input, shape index: {}]
  %s1 = inlined_call_operand.vmem [shape: bf16[1024,51], index: 1, kind: input, shape index: {}]
  %s2 = inlined_call_operand.vmem [shape: f32[1,51], index: 2, kind: input, shape index: {}]
  %s3 = inlined_call_operand.vmem [shape: f32[2,128], index: 3, kind: output, shape index: {}]
  %s4 = sld [smem:[#allocation0]]
  $region22: #{model_with_confidence.1} parent=0
    _
  %s6 = ssub.s32 1, %s4
  %s7 = scalar_select 0, %s6, %s4
  // Predicated region
  $region2: #{model_with_confidence.1} parent=0 // pred_check
    _
  $region3: #{model_with_confidence.1} parent=0 // pred_check_branch
    %9 = sbr.rel (0) target = $region5
  $region4: #{model_with_confidence.1} parent=0 // pred_region
    _
  $region5: #{model_with_confidence.1} parent=0 // pred_fallthru
    _
  // Predicated region
  $region6: #{model_with_confidence.1} parent=0 // pred_check
    _
  $region7: #{model_with_confidence.1} parent=0 // pred_check_branch
    %11 = sbr.rel (0) target = $region9
  $region8: #{model_with_confidence.1} parent=0 // pred_region
    _
  $region9: #{model_with_confidence.1} parent=0 // pred_fallthru
    _
  // Predicated region
  $region10: #{model_with_confidence.1} parent=0 // pred_check
    _
  $region11: #{model_with_confidence.1} parent=0 // pred_check_branch
    %13 = sbr.rel (0) target = $region13
  $region12: #{model_with_confidence.1} parent=0 // pred_region
    _
  $region13: #{model_with_confidence.1} parent=0 // pred_fallthru
    _
  %v15 = vld [vmem:[%s0] sm:$0xff]
  %v16 = vld [vmem:[%s0 + $0x8] sm:$0xff]
  %v19 = vcombine.high %v15, %v15
  %v21 = vunpack.c.l.s4 1983009808
  %v22 = vunpack.c.0.s8 %v21
  %v23 = vlaneseq
  %v24 = vshrl.u32 %v23, 7
  %v25 = vsub.s32 %v22, %v24
  %v26 = vrot.slane %v15, %v25
  %v28 = vunpack.c.l.s4 1983009808
  %v29 = vunpack.c.0.s8 %v28
  %v30 = vlaneseq
  %v31 = vshrl.u32 %v30, 7
  %v32 = vsub.s32 %v29, %v31
  %v33 = vrot.slane %v19, %v32
  %v34 = vcombine.high %v26, %v26
  %v35 = vcombine.high %v33, %v33
  %v36 = vcombine.high %v16, %v16
  %v38 = vunpack.c.l.s4 1983009808
  %v39 = vunpack.c.0.s8 %v38
  %v40 = vlaneseq
  %v41 = vshrl.u32 %v40, 7
  %v42 = vsub.s32 %v39, %v41
  %v43 = vrot.slane %v16, %v42
  %v45 = vunpack.c.l.s4 1983009808
  %v46 = vunpack.c.0.s8 %v45
  %v47 = vlaneseq
  %v48 = vshrl.u32 %v47, 7
  %v49 = vsub.s32 %v46, %v48
  %v50 = vrot.slane %v36, %v49
  %v51 = vcombine.high %v43, %v43
  %v52 = vcombine.high %v50, %v50
  %v61 = vpack.c.bf16 %v26, %v26
  %v62 = vpack.c.bf16 %v34, %v34
  %v63 = vpack.c.bf16 %v33, %v33
  %v64 = vpack.c.bf16 %v35, %v35
  %v65 = vpack.c.bf16 %v43, %v43
  %v66 = vpack.c.bf16 %v51, %v51
  %v67 = vpack.c.bf16 %v50, %v50
  %v68 = vpack.c.bf16 %v52, %v52
  %v69 = vld [vmem:[%s1] sm:$0xf]
  %v70 = vld [vmem:[%s1 + $0x4] sm:$0xf]
  %v71 = vld [vmem:[%s1 + $0x8] sm:$0xf]
  %v72 = vld [vmem:[%s1 + $0xc] sm:$0xf]
  %v73 = vld [vmem:[%s1 + $0x10] sm:$0xf]
  %v74 = vld [vmem:[%s1 + $0x14] sm:$0xf]
  %v75 = vld [vmem:[%s1 + $0x18] sm:$0xf]
  %v76 = vld [vmem:[%s1 + $0x1c] sm:$0xf]
  %v77 = vld [vmem:[%s1 + $0x20] sm:$0xf]
  %v78 = vld [vmem:[%s1 + $0x24] sm:$0xf]
  %v79 = vld [vmem:[%s1 + $0x28] sm:$0xf]
  %v80 = vld [vmem:[%s1 + $0x2c] sm:$0xf]
  %v81 = vld [vmem:[%s1 + $0x30] sm:$0xf]
  %v82 = vld [vmem:[%s1 + $0x34] sm:$0xf]
  %v83 = vld [vmem:[%s1 + $0x38] sm:$0xf]
  %v84 = vld [vmem:[%s1 + $0x3c] sm:$0xf]
  %v85 = vld [vmem:[%s1 + $0x40] sm:$0xf]
  %v86 = vld [vmem:[%s1 + $0x44] sm:$0xf]
  %v87 = vld [vmem:[%s1 + $0x48] sm:$0xf]
  %v88 = vld [vmem:[%s1 + $0x4c] sm:$0xf]
  %v89 = vld [vmem:[%s1 + $0x50] sm:$0xf]
  %v90 = vld [vmem:[%s1 + $0x54] sm:$0xf]
  %v91 = vld [vmem:[%s1 + $0x58] sm:$0xf]
  %v92 = vld [vmem:[%s1 + $0x5c] sm:$0xf]
  %v93 = vld [vmem:[%s1 + $0x60] sm:$0xf]
  %v94 = vld [vmem:[%s1 + $0x64] sm:$0xf]
  %v95 = vld [vmem:[%s1 + $0x68] sm:$0xf]
  %v96 = vld [vmem:[%s1 + $0x6c] sm:$0xf]
  %v97 = vld [vmem:[%s1 + $0x70] sm:$0xf]
  %v98 = vld [vmem:[%s1 + $0x74] sm:$0xf]
  %v99 = vld [vmem:[%s1 + $0x78] sm:$0xf]
  %v100 = vld [vmem:[%s1 + $0x7c] sm:$0xf]
  %v101 = vld [vmem:[%s1 + $0x80] sm:$0xf]
  %v102 = vld [vmem:[%s1 + $0x84] sm:$0xf]
  %v103 = vld [vmem:[%s1 + $0x88] sm:$0xf]
  %v104 = vld [vmem:[%s1 + $0x8c] sm:$0xf]
  %v105 = vld [vmem:[%s1 + $0x90] sm:$0xf]
  %v106 = vld [vmem:[%s1 + $0x94] sm:$0xf]
  %v107 = vld [vmem:[%s1 + $0x98] sm:$0xf]
  %v108 = vld [vmem:[%s1 + $0x9c] sm:$0xf]
  %v109 = vld [vmem:[%s1 + $0xa0] sm:$0xf]
  %v110 = vld [vmem:[%s1 + $0xa4] sm:$0xf]
  %v111 = vld [vmem:[%s1 + $0xa8] sm:$0xf]
  %v112 = vld [vmem:[%s1 + $0xac] sm:$0xf]
  %v113 = vld [vmem:[%s1 + $0xb0] sm:$0xf]
  %v114 = vld [vmem:[%s1 + $0xb4] sm:$0xf]
  %v115 = vld [vmem:[%s1 + $0xb8] sm:$0xf]
  %v116 = vld [vmem:[%s1 + $0xbc] sm:$0xf]
  %v117 = vld [vmem:[%s1 + $0xc0] sm:$0xf]
  %v118 = vld [vmem:[%s1 + $0xc4] sm:$0xf]
  %v119 = vld [vmem:[%s1 + $0xc8] sm:$0xf]
  %v120 = vld [vmem:[%s1 + $0xcc] sm:$0xf]
  %v121 = vld [vmem:[%s1 + $0xd0] sm:$0xf]
  %v122 = vld [vmem:[%s1 + $0xd4] sm:$0xf]
  %v123 = vld [vmem:[%s1 + $0xd8] sm:$0xf]
  %v124 = vld [vmem:[%s1 + $0xdc] sm:$0xf]
  %v125 = vld [vmem:[%s1 + $0xe0] sm:$0xf]
  %v126 = vld [vmem:[%s1 + $0xe4] sm:$0xf]
  %v127 = vld [vmem:[%s1 + $0xe8] sm:$0xf]
  %v128 = vld [vmem:[%s1 + $0xec] sm:$0xf]
  %v129 = vld [vmem:[%s1 + $0xf0] sm:$0xf]
  %v130 = vld [vmem:[%s1 + $0xf4] sm:$0xf]
  %v131 = vld [vmem:[%s1 + $0xf8] sm:$0xf]
  %v132 = vld [vmem:[%s1 + $0xfc] sm:$0xf]
  %v133 = vld [vmem:[%s1 + $0x100] sm:$0xf]
  %v134 = vld [vmem:[%s1 + $0x104] sm:$0xf]
  %v135 = vld [vmem:[%s1 + $0x108] sm:$0xf]
  %v136 = vld [vmem:[%s1 + $0x10c] sm:$0xf]
  %v137 = vld [vmem:[%s1 + $0x110] sm:$0xf]
  %v138 = vld [vmem:[%s1 + $0x114] sm:$0xf]
  %v139 = vld [vmem:[%s1 + $0x118] sm:$0xf]
  %v140 = vld [vmem:[%s1 + $0x11c] sm:$0xf]
  %v141 = vld [vmem:[%s1 + $0x120] sm:$0xf]
  %v142 = vld [vmem:[%s1 + $0x124] sm:$0xf]
  %v143 = vld [vmem:[%s1 + $0x128] sm:$0xf]
  %v144 = vld [vmem:[%s1 + $0x12c] sm:$0xf]
  %v145 = vld [vmem:[%s1 + $0x130] sm:$0xf]
  %v146 = vld [vmem:[%s1 + $0x134] sm:$0xf]
  %v147 = vld [vmem:[%s1 + $0x138] sm:$0xf]
  %v148 = vld [vmem:[%s1 + $0x13c] sm:$0xf]
  %v149 = vld [vmem:[%s1 + $0x140] sm:$0xf]
  %v150 = vld [vmem:[%s1 + $0x144] sm:$0xf]
  %v151 = vld [vmem:[%s1 + $0x148] sm:$0xf]
  %v152 = vld [vmem:[%s1 + $0x14c] sm:$0xf]
  %v153 = vld [vmem:[%s1 + $0x150] sm:$0xf]
  %v154 = vld [vmem:[%s1 + $0x154] sm:$0xf]
  %v155 = vld [vmem:[%s1 + $0x158] sm:$0xf]
  %v156 = vld [vmem:[%s1 + $0x15c] sm:$0xf]
  %v157 = vld [vmem:[%s1 + $0x160] sm:$0xf]
  %v158 = vld [vmem:[%s1 + $0x164] sm:$0xf]
  %v159 = vld [vmem:[%s1 + $0x168] sm:$0xf]
  %v160 = vld [vmem:[%s1 + $0x16c] sm:$0xf]
  %v161 = vld [vmem:[%s1 + $0x170] sm:$0xf]
  %v162 = vld [vmem:[%s1 + $0x174] sm:$0xf]
  %v163 = vld [vmem:[%s1 + $0x178] sm:$0xf]
  %v164 = vld [vmem:[%s1 + $0x17c] sm:$0xf]
  %v165 = vld [vmem:[%s1 + $0x180] sm:$0xf]
  %v166 = vld [vmem:[%s1 + $0x184] sm:$0xf]
  %v167 = vld [vmem:[%s1 + $0x188] sm:$0xf]
  %v168 = vld [vmem:[%s1 + $0x18c] sm:$0xf]
  %v169 = vld [vmem:[%s1 + $0x190] sm:$0xf]
  %v170 = vld [vmem:[%s1 + $0x194] sm:$0xf]
  %v171 = vld [vmem:[%s1 + $0x198] sm:$0xf]
  %v172 = vld [vmem:[%s1 + $0x19c] sm:$0xf]
  %v173 = vld [vmem:[%s1 + $0x1a0] sm:$0xf]
  %v174 = vld [vmem:[%s1 + $0x1a4] sm:$0xf]
  %v175 = vld [vmem:[%s1 + $0x1a8] sm:$0xf]
  %v176 = vld [vmem:[%s1 + $0x1ac] sm:$0xf]
  %v177 = vld [vmem:[%s1 + $0x1b0] sm:$0xf]
  %v178 = vld [vmem:[%s1 + $0x1b4] sm:$0xf]
  %v179 = vld [vmem:[%s1 + $0x1b8] sm:$0xf]
  %v180 = vld [vmem:[%s1 + $0x1bc] sm:$0xf]
  %v181 = vld [vmem:[%s1 + $0x1c0] sm:$0xf]
  %v182 = vld [vmem:[%s1 + $0x1c4] sm:$0xf]
  %v183 = vld [vmem:[%s1 + $0x1c8] sm:$0xf]
  %v184 = vld [vmem:[%s1 + $0x1cc] sm:$0xf]
  %v185 = vld [vmem:[%s1 + $0x1d0] sm:$0xf]
  %v186 = vld [vmem:[%s1 + $0x1d4] sm:$0xf]
  %v187 = vld [vmem:[%s1 + $0x1d8] sm:$0xf]
  %v188 = vld [vmem:[%s1 + $0x1dc] sm:$0xf]
  %v189 = vld [vmem:[%s1 + $0x1e0] sm:$0xf]
  %v190 = vld [vmem:[%s1 + $0x1e4] sm:$0xf]
  %v191 = vld [vmem:[%s1 + $0x1e8] sm:$0xf]
  %v192 = vld [vmem:[%s1 + $0x1ec] sm:$0xf]
  %v193 = vld [vmem:[%s1 + $0x1f0] sm:$0xf]
  %v194 = vld [vmem:[%s1 + $0x1f4] sm:$0xf]
  %v195 = vld [vmem:[%s1 + $0x1f8] sm:$0xf]
  %v196 = vld [vmem:[%s1 + $0x1fc] sm:$0xf]
  %v197 = vld [vmem:[%s2] sm:$0x1]
  %v199 = vlaneseq
  %v200 = vshrl.u32 %v199, 7
  %v201 = vsub.s32 0, %v200
  %v202 = vrot.slane %v197, %v201
  %v332 = vunpack.c.l.b16 %v69
  %v333 = vunpack.c.l.b16 %v70
  %v334 = vunpack.c.l.b16 %v71
  %v335 = vunpack.c.l.b16 %v72
  %v336 = vunpack.c.l.b16 %v73
  %v337 = vunpack.c.l.b16 %v74
  %v338 = vunpack.c.l.b16 %v75
  %v339 = vunpack.c.l.b16 %v76
  %v340 = vunpack.c.l.b16 %v77
  %v341 = vunpack.c.l.b16 %v78
  %v342 = vunpack.c.l.b16 %v79
  %v343 = vunpack.c.l.b16 %v80
  %v344 = vunpack.c.l.b16 %v81
  %v345 = vunpack.c.l.b16 %v82
  %v346 = vunpack.c.l.b16 %v83
  %v347 = vunpack.c.l.b16 %v84
  %v348 = vunpack.c.l.b16 %v85
  %v349 = vunpack.c.l.b16 %v86
  %v350 = vunpack.c.l.b16 %v87
  %v351 = vunpack.c.l.b16 %v88
  %v352 = vunpack.c.l.b16 %v89
  %v353 = vunpack.c.l.b16 %v90
  %v354 = vunpack.c.l.b16 %v91
  %v355 = vunpack.c.l.b16 %v92
  %v356 = vunpack.c.l.b16 %v93
  %v357 = vunpack.c.l.b16 %v94
  %v358 = vunpack.c.l.b16 %v95
  %v359 = vunpack.c.l.b16 %v96
  %v360 = vunpack.c.l.b16 %v97
  %v361 = vunpack.c.l.b16 %v98
  %v362 = vunpack.c.l.b16 %v99
  %v363 = vunpack.c.l.b16 %v100
  %v364 = vunpack.c.l.b16 %v101
  %v365 = vunpack.c.l.b16 %v102
  %v366 = vunpack.c.l.b16 %v103
  %v367 = vunpack.c.l.b16 %v104
  %v368 = vunpack.c.l.b16 %v105
  %v369 = vunpack.c.l.b16 %v106
  %v370 = vunpack.c.l.b16 %v107
  %v371 = vunpack.c.l.b16 %v108
  %v372 = vunpack.c.l.b16 %v109
  %v373 = vunpack.c.l.b16 %v110
  %v374 = vunpack.c.l.b16 %v111
  %v375 = vunpack.c.l.b16 %v112
  %v376 = vunpack.c.l.b16 %v113
  %v377 = vunpack.c.l.b16 %v114
  %v378 = vunpack.c.l.b16 %v115
  %v379 = vunpack.c.l.b16 %v116
  %v380 = vunpack.c.l.b16 %v117
  %v381 = vunpack.c.l.b16 %v118
  %v382 = vunpack.c.l.b16 %v119
  %v383 = vunpack.c.l.b16 %v120
  %v384 = vunpack.c.l.b16 %v121
  %v385 = vunpack.c.l.b16 %v122
  %v386 = vunpack.c.l.b16 %v123
  %v387 = vunpack.c.l.b16 %v124
  %v388 = vunpack.c.l.b16 %v125
  %v389 = vunpack.c.l.b16 %v126
  %v390 = vunpack.c.l.b16 %v127
  %v391 = vunpack.c.l.b16 %v128
  %v392 = vunpack.c.l.b16 %v129
  %v393 = vunpack.c.l.b16 %v130
  %v394 = vunpack.c.l.b16 %v131
  %v395 = vunpack.c.l.b16 %v132
  %v396 = vunpack.c.l.b16 %v133
  %v397 = vunpack.c.l.b16 %v134
  %v398 = vunpack.c.l.b16 %v135
  %v399 = vunpack.c.l.b16 %v136
  %v400 = vunpack.c.l.b16 %v137
  %v401 = vunpack.c.l.b16 %v138
  %v402 = vunpack.c.l.b16 %v139
  %v403 = vunpack.c.l.b16 %v140
  %v404 = vunpack.c.l.b16 %v141
  %v405 = vunpack.c.l.b16 %v142
  %v406 = vunpack.c.l.b16 %v143
  %v407 = vunpack.c.l.b16 %v144
  %v408 = vunpack.c.l.b16 %v145
  %v409 = vunpack.c.l.b16 %v146
  %v410 = vunpack.c.l.b16 %v147
  %v411 = vunpack.c.l.b16 %v148
  %v412 = vunpack.c.l.b16 %v149
  %v413 = vunpack.c.l.b16 %v150
  %v414 = vunpack.c.l.b16 %v151
  %v415 = vunpack.c.l.b16 %v152
  %v416 = vunpack.c.l.b16 %v153
  %v417 = vunpack.c.l.b16 %v154
  %v418 = vunpack.c.l.b16 %v155
  %v419 = vunpack.c.l.b16 %v156
  %v420 = vunpack.c.l.b16 %v157
  %v421 = vunpack.c.l.b16 %v158
  %v422 = vunpack.c.l.b16 %v159
  %v423 = vunpack.c.l.b16 %v160
  %v424 = vunpack.c.l.b16 %v161
  %v425 = vunpack.c.l.b16 %v162
  %v426 = vunpack.c.l.b16 %v163
  %v427 = vunpack.c.l.b16 %v164
  %v428 = vunpack.c.l.b16 %v165
  %v429 = vunpack.c.l.b16 %v166
  %v430 = vunpack.c.l.b16 %v167
  %v431 = vunpack.c.l.b16 %v168
  %v432 = vunpack.c.l.b16 %v169
  %v433 = vunpack.c.l.b16 %v170
  %v434 = vunpack.c.l.b16 %v171
  %v435 = vunpack.c.l.b16 %v172
  %v436 = vunpack.c.l.b16 %v173
  %v437 = vunpack.c.l.b16 %v174
  %v438 = vunpack.c.l.b16 %v175
  %v439 = vunpack.c.l.b16 %v176
  %v440 = vunpack.c.l.b16 %v177
  %v441 = vunpack.c.l.b16 %v178
  %v442 = vunpack.c.l.b16 %v179
  %v443 = vunpack.c.l.b16 %v180
  %v444 = vunpack.c.l.b16 %v181
  %v445 = vunpack.c.l.b16 %v182
  %v446 = vunpack.c.l.b16 %v183
  %v447 = vunpack.c.l.b16 %v184
  %v448 = vunpack.c.l.b16 %v185
  %v449 = vunpack.c.l.b16 %v186
  %v450 = vunpack.c.l.b16 %v187
  %v451 = vunpack.c.l.b16 %v188
  %v452 = vunpack.c.l.b16 %v189
  %v453 = vunpack.c.l.b16 %v190
  %v454 = vunpack.c.l.b16 %v191
  %v455 = vunpack.c.l.b16 %v192
  %v456 = vunpack.c.l.b16 %v193
  %v457 = vunpack.c.l.b16 %v194
  %v458 = vunpack.c.l.b16 %v195
  %v459 = vunpack.c.l.b16 %v196
  %v460 = vpack.c.b16 %v333, %v332
  %v461 = vpack.c.b16 %v335, %v334
  %v462 = vpack.c.b16 %v337, %v336
  %v463 = vpack.c.b16 %v339, %v338
  %v464 = vpack.c.b16 %v341, %v340
  %v465 = vpack.c.b16 %v343, %v342
  %v466 = vpack.c.b16 %v345, %v344
  %v467 = vpack.c.b16 %v347, %v346
  %v468 = vpack.c.b16 %v349, %v348
  %v469 = vpack.c.b16 %v351, %v350
  %v470 = vpack.c.b16 %v353, %v352
  %v471 = vpack.c.b16 %v355, %v354
  %v472 = vpack.c.b16 %v357, %v356
  %v473 = vpack.c.b16 %v359, %v358
  %v474 = vpack.c.b16 %v361, %v360
  %v475 = vpack.c.b16 %v363, %v362
  %v476 = vpack.c.b16 %v365, %v364
  %v477 = vpack.c.b16 %v367, %v366
  %v478 = vpack.c.b16 %v369, %v368
  %v479 = vpack.c.b16 %v371, %v370
  %v480 = vpack.c.b16 %v373, %v372
  %v481 = vpack.c.b16 %v375, %v374
  %v482 = vpack.c.b16 %v377, %v376
  %v483 = vpack.c.b16 %v379, %v378
  %v484 = vpack.c.b16 %v381, %v380
  %v485 = vpack.c.b16 %v383, %v382
  %v486 = vpack.c.b16 %v385, %v384
  %v487 = vpack.c.b16 %v387, %v386
  %v488 = vpack.c.b16 %v389, %v388
  %v489 = vpack.c.b16 %v391, %v390
  %v490 = vpack.c.b16 %v393, %v392
  %v491 = vpack.c.b16 %v395, %v394
  %v492 = vpack.c.b16 %v397, %v396
  %v493 = vpack.c.b16 %v399, %v398
  %v494 = vpack.c.b16 %v401, %v400
  %v495 = vpack.c.b16 %v403, %v402
  %v496 = vpack.c.b16 %v405, %v404
  %v497 = vpack.c.b16 %v407, %v406
  %v498 = vpack.c.b16 %v409, %v408
  %v499 = vpack.c.b16 %v411, %v410
  %v500 = vpack.c.b16 %v413, %v412
  %v501 = vpack.c.b16 %v415, %v414
  %v502 = vpack.c.b16 %v417, %v416
  %v503 = vpack.c.b16 %v419, %v418
  %v504 = vpack.c.b16 %v421, %v420
  %v505 = vpack.c.b16 %v423, %v422
  %v506 = vpack.c.b16 %v425, %v424
  %v507 = vpack.c.b16 %v427, %v426
  %v508 = vpack.c.b16 %v429, %v428
  %v509 = vpack.c.b16 %v431, %v430
  %v510 = vpack.c.b16 %v433, %v432
  %v511 = vpack.c.b16 %v435, %v434
  %v512 = vpack.c.b16 %v437, %v436
  %v513 = vpack.c.b16 %v439, %v438
  %v514 = vpack.c.b16 %v441, %v440
  %v515 = vpack.c.b16 %v443, %v442
  %v516 = vpack.c.b16 %v445, %v444
  %v517 = vpack.c.b16 %v447, %v446
  %v518 = vpack.c.b16 %v449, %v448
  %v519 = vpack.c.b16 %v451, %v450
  %v520 = vpack.c.b16 %v453, %v452
  %v521 = vpack.c.b16 %v455, %v454
  %v522 = vpack.c.b16 %v457, %v456
  %v523 = vpack.c.b16 %v459, %v458
  %588 = vmatprep.subr.bf16.mxu0 0
  %589 = vmatpush1.bf16.msra.mxu0 %v460
  %590 = vmatprep.subr.bf16.mxu0 0
  %591 = vmatpush1.bf16.msra.mxu0 %v461
  %592 = vmatprep.subr.bf16.mxu0 0
  %593 = vmatpush1.bf16.msra.mxu0 %v462
  %594 = vmatprep.subr.bf16.mxu0 0
  %595 = vmatpush1.bf16.msra.mxu0 %v463
  %596 = vmatprep.subr.bf16.mxu0 0
  %597 = vmatpush1.bf16.msra.mxu0 %v464
  %598 = vmatprep.subr.bf16.mxu0 0
  %599 = vmatpush1.bf16.msra.mxu0 %v465
  %600 = vmatprep.subr.bf16.mxu0 0
  %601 = vmatpush1.bf16.msra.mxu0 %v466
  %602 = vmatprep.subr.bf16.mxu0 0
  %603 = vmatpush1.bf16.msra.mxu0 %v467
  %604 = vmatprep.subr.bf16.mxu0 0
  %605 = vmatpush1.bf16.msra.mxu0 %v468
  %606 = vmatprep.subr.bf16.mxu0 0
  %607 = vmatpush1.bf16.msra.mxu0 %v469
  %608 = vmatprep.subr.bf16.mxu0 0
  %609 = vmatpush1.bf16.msra.mxu0 %v470
  %610 = vmatprep.subr.bf16.mxu0 0
  %611 = vmatpush1.bf16.msra.mxu0 %v471
  %612 = vmatprep.subr.bf16.mxu0 0
  %613 = vmatpush1.bf16.msra.mxu0 %v472
  %614 = vmatprep.subr.bf16.mxu0 0
  %615 = vmatpush1.bf16.msra.mxu0 %v473
  %616 = vmatprep.subr.bf16.mxu0 0
  %617 = vmatpush1.bf16.msra.mxu0 %v474
  %618 = vmatprep.subr.bf16.mxu0 0
  %619 = vmatpush1.bf16.msra.mxu0 %v475
  %620 = vmatprep.mubr.bf16.mxu0 %v62
  %621 = vmatmul.mubr.bf16.gmra.mrb[0].mxu0 %v61
  %v622 = vpop.f32.mrb[0].mxu0
  %v623 = vadd.f32 %v202, %v622
  %v624 = vpop.f32.mrb[0].mxu0
  %v625 = vpop.f32.mrb[0].mxu0
  %v626 = vpop.f32.mrb[0].mxu0
  %627 = vdwg.mxu0
  %628 = vmatprep.subr.bf16.mxu0 0
  %629 = vmatpush1.bf16.msra.mxu0 %v476
  %630 = vmatprep.subr.bf16.mxu0 0
  %631 = vmatpush1.bf16.msra.mxu0 %v477
  %632 = vmatprep.subr.bf16.mxu0 0
  %633 = vmatpush1.bf16.msra.mxu0 %v478
  %634 = vmatprep.subr.bf16.mxu0 0
  %635 = vmatpush1.bf16.msra.mxu0 %v479
  %636 = vmatprep.subr.bf16.mxu0 0
  %637 = vmatpush1.bf16.msra.mxu0 %v480
  %638 = vmatprep.subr.bf16.mxu0 0
  %639 = vmatpush1.bf16.msra.mxu0 %v481
  %640 = vmatprep.subr.bf16.mxu0 0
  %641 = vmatpush1.bf16.msra.mxu0 %v482
  %642 = vmatprep.subr.bf16.mxu0 0
  %643 = vmatpush1.bf16.msra.mxu0 %v483
  %644 = vmatprep.subr.bf16.mxu0 0
  %645 = vmatpush1.bf16.msra.mxu0 %v484
  %646 = vmatprep.subr.bf16.mxu0 0
  %647 = vmatpush1.bf16.msra.mxu0 %v485
  %648 = vmatprep.subr.bf16.mxu0 0
  %649 = vmatpush1.bf16.msra.mxu0 %v486
  %650 = vmatprep.subr.bf16.mxu0 0
  %651 = vmatpush1.bf16.msra.mxu0 %v487
  %652 = vmatprep.subr.bf16.mxu0 0
  %653 = vmatpush1.bf16.msra.mxu0 %v488
  %654 = vmatprep.subr.bf16.mxu0 0
  %655 = vmatpush1.bf16.msra.mxu0 %v489
  %656 = vmatprep.subr.bf16.mxu0 0
  %657 = vmatpush1.bf16.msra.mxu0 %v490
  %658 = vmatprep.subr.bf16.mxu0 0
  %659 = vmatpush1.bf16.msra.mxu0 %v491
  %660 = vmatprep.mubr.bf16.mxu0 %v64
  %661 = vmatmul.mubr.bf16.gmra.mrb[0].mxu0 %v63
  %v662 = vpop.f32.mrb[0].mxu0
  %v663 = vadd.f32 %v623, %v662
  %v664 = vpop.f32.mrb[0].mxu0
  %v665 = vpop.f32.mrb[0].mxu0
  %v666 = vpop.f32.mrb[0].mxu0
  %667 = vdwg.mxu0
  %668 = vmatprep.subr.bf16.mxu0 0
  %669 = vmatpush1.bf16.msra.mxu0 %v492
  %670 = vmatprep.subr.bf16.mxu0 0
  %671 = vmatpush1.bf16.msra.mxu0 %v493
  %672 = vmatprep.subr.bf16.mxu0 0
  %673 = vmatpush1.bf16.msra.mxu0 %v494
  %674 = vmatprep.subr.bf16.mxu0 0
  %675 = vmatpush1.bf16.msra.mxu0 %v495
  %676 = vmatprep.subr.bf16.mxu0 0
  %677 = vmatpush1.bf16.msra.mxu0 %v496
  %678 = vmatprep.subr.bf16.mxu0 0
  %679 = vmatpush1.bf16.msra.mxu0 %v497
  %680 = vmatprep.subr.bf16.mxu0 0
  %681 = vmatpush1.bf16.msra.mxu0 %v498
  %682 = vmatprep.subr.bf16.mxu0 0
  %683 = vmatpush1.bf16.msra.mxu0 %v499
  %684 = vmatprep.subr.bf16.mxu0 0
  %685 = vmatpush1.bf16.msra.mxu0 %v500
  %686 = vmatprep.subr.bf16.mxu0 0
  %687 = vmatpush1.bf16.msra.mxu0 %v501
  %688 = vmatprep.subr.bf16.mxu0 0
  %689 = vmatpush1.bf16.msra.mxu0 %v502
  %690 = vmatprep.subr.bf16.mxu0 0
  %691 = vmatpush1.bf16.msra.mxu0 %v503
  %692 = vmatprep.subr.bf16.mxu0 0
  %693 = vmatpush1.bf16.msra.mxu0 %v504
  %694 = vmatprep.subr.bf16.mxu0 0
  %695 = vmatpush1.bf16.msra.mxu0 %v505
  %696 = vmatprep.subr.bf16.mxu0 0
  %697 = vmatpush1.bf16.msra.mxu0 %v506
  %698 = vmatprep.subr.bf16.mxu0 0
  %699 = vmatpush1.bf16.msra.mxu0 %v507
  %700 = vmatprep.mubr.bf16.mxu0 %v66
  %701 = vmatmul.mubr.bf16.gmra.mrb[0].mxu0 %v65
  %v702 = vpop.f32.mrb[0].mxu0
  %v703 = vadd.f32 %v663, %v702
  %v704 = vpop.f32.mrb[0].mxu0
  %v705 = vpop.f32.mrb[0].mxu0
  %v706 = vpop.f32.mrb[0].mxu0
  %707 = vdwg.mxu0
  %708 = vmatprep.subr.bf16.mxu0 0
  %709 = vmatpush1.bf16.msra.mxu0 %v508
  %710 = vmatprep.subr.bf16.mxu0 0
  %711 = vmatpush1.bf16.msra.mxu0 %v509
  %712 = vmatprep.subr.bf16.mxu0 0
  %713 = vmatpush1.bf16.msra.mxu0 %v510
  %714 = vmatprep.subr.bf16.mxu0 0
  %715 = vmatpush1.bf16.msra.mxu0 %v511
  %716 = vmatprep.subr.bf16.mxu0 0
  %717 = vmatpush1.bf16.msra.mxu0 %v512
  %718 = vmatprep.subr.bf16.mxu0 0
  %719 = vmatpush1.bf16.msra.mxu0 %v513
  %720 = vmatprep.subr.bf16.mxu0 0
  %721 = vmatpush1.bf16.msra.mxu0 %v514
  %722 = vmatprep.subr.bf16.mxu0 0
  %723 = vmatpush1.bf16.msra.mxu0 %v515
  %724 = vmatprep.subr.bf16.mxu0 0
  %725 = vmatpush1.bf16.msra.mxu0 %v516
  %726 = vmatprep.subr.bf16.mxu0 0
  %727 = vmatpush1.bf16.msra.mxu0 %v517
  %728 = vmatprep.subr.bf16.mxu0 0
  %729 = vmatpush1.bf16.msra.mxu0 %v518
  %730 = vmatprep.subr.bf16.mxu0 0
  %731 = vmatpush1.bf16.msra.mxu0 %v519
  %732 = vmatprep.subr.bf16.mxu0 0
  %733 = vmatpush1.bf16.msra.mxu0 %v520
  %734 = vmatprep.subr.bf16.mxu0 0
  %735 = vmatpush1.bf16.msra.mxu0 %v521
  %736 = vmatprep.subr.bf16.mxu0 0
  %737 = vmatpush1.bf16.msra.mxu0 %v522
  %738 = vmatprep.subr.bf16.mxu0 0
  %739 = vmatpush1.bf16.msra.mxu0 %v523
  %740 = vmatprep.mubr.bf16.mxu0 %v68
  %741 = vmatmul.mubr.bf16.gmra.mrb[0].mxu0 %v67
  %v742 = vpop.f32.mrb[0].mxu0
  %v743 = vadd.f32 %v703, %v742
  %v744 = vpop.f32.mrb[0].mxu0
  %v745 = vpop.f32.mrb[0].mxu0
  %v746 = vpop.f32.mrb[0].mxu0
  %747 = vdwg.mxu0
  %vm748 = vcmask 411008
  %v749 = vsel %vm748, %v743, -inf
  %750 = vmax.xlane.f32.xlu0 %v749
  %v751 = vpop.xlane.xlu0 %750
  %v752 = vsub.f32 %v743, %v751
  %v753 = vmul.f32 %v752, 1.442695
  %v754 = vpow.pop %v753
  %756 = vrot.lane.b32.xlu0 %v754, 80
  %v757 = vpop.permute.xlu0 %756
  %vm759 = vcmask 17408
  %v760 = vsel %vm759, %v757, 0.0
  %761 = vadd.xlane.f32.xlu0 %v760
  %v762 = vpop.xlane.xlu0 %761
  %v763 = vrcp.pop %v762
  %v764 = vmul.f32 %v754, %v763
  %765 = vst [vmem:[%s3] sm:$0x3] 0.0
  %vm766 = vcmask 386048
  %767 = vst.msk [vmem:[%s3] sm:$0x3] %vm766, %v743
  %768 = vst.msk [vmem:[%s3] sm:$0x3] %vm748, %v764
  // Predicated region
  $region14: #{model_with_confidence.1} parent=0 // pred_check
    _
  $region15: #{model_with_confidence.1} parent=0 // pred_check_branch
    %770 = sbr.rel (0) target = $region17
  $region16: #{model_with_confidence.1} parent=0 // pred_region
    _
  $region17: #{model_with_confidence.1} parent=0 // pred_fallthru
    _
  // Predicated region
  $region18: #{model_with_confidence.1} parent=0 // pred_check
    _
  $region19: #{model_with_confidence.1} parent=0 // pred_check_branch
    %772 = sbr.rel (0) target = $region21
  $region20: #{model_with_confidence.1} parent=0 // pred_region
    _
  $region21: #{model_with_confidence.1} parent=0 // pred_fallthru
    _

</llo_original>
